<compile_context>
chip_gen: v7x
topology: tpu7x:2x2x1
jax: 0.10.0
libtpu: 0.0.40
codegen_flags: <defaults>
</compile_context>

<pallas_src>
import jax
import jax.numpy as jnp
from jax.experimental import pallas as pl
from jax.experimental.pallas import tpu as pltpu


def _round_up(x, m):
    return ((x + m - 1) // m) * m


def _cdiv(a, b):
    return (a + b - 1) // b


def _fused_kernel(idx_ref, p_ref, b_ref, out_ref):
    """One grid step processes TILE_N hyperedges.

    idx_ref : (TILE_N, 3)   int32  row ids into the fused-table row space
    p_ref   : (R_pad, F)    bf16   precomputed  blockdiag(tables) @ W^T   (resident)
    b_ref   : (1, F)        f32    fusion bias                            (resident)
    out_ref : (TILE_N, F)   f32
    """
    tile_n = out_ref.shape[0]
    r = p_ref.shape[0]

    # Gather + concat + Linear fused into a single MXU matmul: each row hits
    # exactly one column in each of the three disjoint vocab ranges, so
    # sel @ P == E_s[i] @ W_s^T + E_m[j] @ W_m^T + E_l[k] @ W_l^T == Linear(concat).
    col = jax.lax.broadcasted_iota(jnp.int32, (tile_n, r), 1)
    idx = idx_ref[...]                                              # (TILE_N, 3)
    hit = (col == idx[:, 0:1]) | (col == idx[:, 1:2]) | (col == idx[:, 2:3])
    sel = hit.astype(p_ref.dtype)                                   # (TILE_N, R_pad)

    acc = jnp.dot(sel, p_ref[...], preferred_element_type=jnp.float32)
    out_ref[...] = (acc + b_ref[...]).astype(out_ref.dtype)         # f32 epilogue


def prepare_params(params, compute_dtype=jnp.bfloat16):
    """Hoisted out of the forward path: fold tables and fusion weight into a
    single [R_pad, F] product slab (f32 matmul, then cast to compute_dtype)."""
    e_s, e_m, e_l = params["embed_seqn"], params["embed_meal"], params["embed_loc"]
    w, b = params["fusion_w"], params["fusion_b"]
    num_s, d_s = e_s.shape
    num_m, d_m = e_m.shape
    num_l, _ = e_l.shape
    f = b.shape[0]
    r = num_s + num_m + num_l
    r_pad = _round_up(r, 8)

    w_s = w[:, :d_s]
    w_m = w[:, d_s:d_s + d_m]
    w_l = w[:, d_s + d_m:]
    # Equivalent to blockdiag([E_s|E_m|E_l]) @ W^T without materializing zeros.
    p = jnp.concatenate([e_s @ w_s.T, e_m @ w_m.T, e_l @ w_l.T], axis=0)  # (r, f) f32
    p = jnp.pad(p, ((0, r_pad - r), (0, 0))).astype(compute_dtype)

    return {
        "p": p,                                                   # (R_pad, F) bf16
        "b": b.reshape(1, f).astype(jnp.float32),                 # (1, F) f32
        "offsets": jnp.array([0, num_s, num_s + num_m], jnp.int32),
    }


def hyperedge_embedding_forward(prepared, seqn_idx, meal_idx, loc_idx, *,
                                max_tile_n=512, min_grid_steps=2):
    p, b, offsets = prepared["p"], prepared["b"], prepared["offsets"]
    r_pad, f = p.shape
    n = seqn_idx.shape[0]

    # Balanced tiling: >=min_grid_steps steps (v7x: both TensorCores busy),
    # tiles sublane-aligned, remainder waste bounded by <8 rows per tile.
    n8 = _round_up(max(n, 1), 8)
    num_tiles = max(min_grid_steps, _cdiv(n8, max_tile_n))
    tile_n = _round_up(_cdiv(n8, num_tiles), 8)
    num_tiles = _cdiv(n8, tile_n)
    n_pad = num_tiles * tile_n

    # Indices shifted into the fused-table row space; padded rows -> row 0
    # (valid row, output rows sliced off below).
    idx_all = (jnp.stack([seqn_idx, meal_idx, loc_idx], axis=-1).astype(jnp.int32)
               + offsets[None, :])                                  # (N, 3)
    idx_all = jnp.pad(idx_all, ((0, n_pad - n), (0, 0)))

    out = pl.pallas_call(
        _fused_kernel,
        out_shape=jax.ShapeDtypeStruct((n_pad, f), jnp.float32),
        grid=(num_tiles,),
        in_specs=[
            pl.BlockSpec((tile_n, 3), lambda i: (i, 0)),     # per-tile indices
            pl.BlockSpec((r_pad, f), lambda i: (0, 0)),      # resident fused table
            pl.BlockSpec((1, f), lambda i: (0, 0)),          # resident bias
        ],
        out_specs=pl.BlockSpec((tile_n, f), lambda i: (i, 0)),
        compiler_params=pltpu.CompilerParams(
            dimension_semantics=("parallel",)),
    )(idx_all, p, b)

    return out if n_pad == n else out[:n]


def init_params(key, num_seqn, num_meal, num_loc, d_seqn, d_meal, d_loc,
                fusion_out_dim):
    """Deterministic init mimicking PyTorch defaults:
    Embedding ~ N(0,1); Linear weight/bias ~ U(-1/sqrt(fan_in), 1/sqrt(fan_in))."""
    k1, k2, k3, k4, k5 = jax.random.split(key, 5)
    d_in = d_seqn + d_meal + d_loc
    bound = 1.0 / (d_in ** 0.5)
    return {
        "embed_seqn": jax.random.normal(k1, (num_seqn, d_seqn), jnp.float32),
        "embed_meal": jax.random.normal(k2, (num_meal, d_meal), jnp.float32),
        "embed_loc": jax.random.normal(k3, (num_loc, d_loc), jnp.float32),
        "fusion_w": jax.random.uniform(k4, (fusion_out_dim, d_in), jnp.float32,
                                       -bound, bound),
        "fusion_b": jax.random.uniform(k5, (fusion_out_dim,), jnp.float32,
                                       -bound, bound),
    }


def _reference_forward(params, seqn_idx, meal_idx, loc_idx):
    """Pure-JAX f32 reference (= PyTorch forward)."""
    s = jnp.take(params["embed_seqn"], seqn_idx, axis=0)
    m = jnp.take(params["embed_meal"], meal_idx, axis=0)
    l = jnp.take(params["embed_loc"], loc_idx, axis=0)
    combined = jnp.concatenate([s, m, l], axis=-1)
    return combined @ params["fusion_w"].T + params["fusion_b"]


def _reference_from_prepared(prepared, seqn_idx, meal_idx, loc_idx):
    """Precision-matched reference: same bf16-rounded fused table, f32 sums."""
    p = prepared["p"].astype(jnp.float32)
    off = prepared["offsets"]
    out = (jnp.take(p, seqn_idx + off[0], axis=0)
           + jnp.take(p, meal_idx + off[1], axis=0)
           + jnp.take(p, loc_idx + off[2], axis=0))
    return out + prepared["b"]


if __name__ == "__main__":
    # Small shapes consistent with the module; n_edges=600 exercises balanced
    # tiling (2 tiles of 304), row padding, and a 2-step "parallel" grid.
    num_seqn, num_meal, num_loc = 16, 8, 4
    d_seqn, d_meal, d_loc = 16, 8, 8
    fusion_out_dim = 32
    n_edges = 600

    root = jax.random.PRNGKey(0)
    kp, ki1, ki2, ki3 = jax.random.split(root, 4)
    params = init_params(kp, num_seqn, num_meal, num_loc,
                         d_seqn, d_meal, d_loc, fusion_out_dim)

    seqn_idx = jax.random.randint(ki1, (n_edges,), 0, num_seqn, jnp.int32)
    meal_idx = jax.random.randint(ki2, (n_edges,), 0, num_meal, jnp.int32)
    loc_idx = jax.random.randint(ki3, (n_edges,), 0, num_loc, jnp.int32)

    prepared = prepare_params(params)            # one-time parameter prep
    out = hyperedge_embedding_forward(prepared, seqn_idx, meal_idx, loc_idx)
    out = jax.block_until_ready(out)
    assert out.shape == (n_edges, fusion_out_dim)

    # Correctness vs. precision-matched reference (same bf16-rounded table).
    ref_pm = _reference_from_prepared(prepared, seqn_idx, meal_idx, loc_idx)
    assert jnp.allclose(out, ref_pm, atol=1e-4, rtol=1e-4), \
        float(jnp.max(jnp.abs(out - ref_pm)))

    # Loose sanity check vs. full-f32 PyTorch-equivalent reference
    # (difference is only the bf16 rounding of the fused table).
    ref_f32 = _reference_forward(params, seqn_idx, meal_idx, loc_idx)
    assert jnp.allclose(out, ref_f32, atol=5e-2, rtol=0.0), \
        float(jnp.max(jnp.abs(out - ref_f32)))

    print("KERNEL_OK")
</pallas_src>

<mosaic_0001>
module attributes {stable_mosaic.version = 11 : i64} {
  func.func @_fused_kernel(%arg0: i32, %arg1: memref<304x3xi32, #tpu.memory_space<vmem>>, %arg2: memref<32x32xbf16, #tpu.memory_space<vmem>>, %arg3: memref<1x32xf32, #tpu.memory_space<vmem>>, %arg4: memref<304x32xf32, #tpu.memory_space<vmem>>) attributes {dimension_semantics = [#tpu.dimension_semantics<parallel>], iteration_bounds = array<i64: 2>, scalar_prefetch = 0 : i64, scratch_operands = 0 : i64, tpu.core_type = #tpu.core_type<tc>, window_params = [{transform_indices = @transform_0, window_bounds = array<i64: 304, 3>}, {pipeline_mode = #tpu.pipeline_mode<synchronous>, transform_indices = @transform_1, window_bounds = array<i64: 32, 32>}, {pipeline_mode = #tpu.pipeline_mode<synchronous>, transform_indices = @transform_2, window_bounds = array<i64: 1, 32>}, {transform_indices = @transform_3, window_bounds = array<i64: 304, 32>}]} {
    %0 = tpu.iota {dimensions = array<i32: 1>} : vector<304x32xi32>
    %c0 = arith.constant 0 : index
    %c0_0 = arith.constant 0 : index
    %1 = vector.load %arg1[%c0, %c0_0] : memref<304x3xi32, #tpu.memory_space<vmem>>, vector<304x3xi32>
    %2 = vector.extract_strided_slice %1 {offsets = [0, 0], sizes = [304, 1], strides = [1, 1]} : vector<304x3xi32> to vector<304x1xi32>
    %3 = vector.broadcast %2 : vector<304x1xi32> to vector<304x32xi32>
    %4 = arith.cmpi eq, %0, %3 : vector<304x32xi32>
    %5 = vector.extract_strided_slice %1 {offsets = [0, 1], sizes = [304, 1], strides = [1, 1]} : vector<304x3xi32> to vector<304x1xi32>
    %6 = vector.broadcast %5 : vector<304x1xi32> to vector<304x32xi32>
    %7 = arith.cmpi eq, %0, %6 : vector<304x32xi32>
    %8 = arith.ori %4, %7 : vector<304x32xi1>
    %9 = vector.extract_strided_slice %1 {offsets = [0, 2], sizes = [304, 1], strides = [1, 1]} : vector<304x3xi32> to vector<304x1xi32>
    %10 = vector.broadcast %9 : vector<304x1xi32> to vector<304x32xi32>
    %11 = arith.cmpi eq, %0, %10 : vector<304x32xi32>
    %12 = arith.ori %8, %11 : vector<304x32xi1>
    %13 = arith.extui %12 : vector<304x32xi1> to vector<304x32xi32>
    %14 = arith.sitofp %13 : vector<304x32xi32> to vector<304x32xf32>
    %15 = arith.truncf %14 : vector<304x32xf32> to vector<304x32xbf16>
    %c0_1 = arith.constant 0 : index
    %c0_2 = arith.constant 0 : index
    %16 = vector.load %arg2[%c0_1, %c0_2] : memref<32x32xbf16, #tpu.memory_space<vmem>>, vector<32x32xbf16>
    %cst = arith.constant dense<0.000000e+00> : vector<304x32xf32>
    %17 = tpu.matmul %15, %16, %cst {dimension_numbers = #tpu.dot_dimension_numbers<[1], [0], [0], [1], [0, 0, 1, 1], [], []>} : vector<304x32xbf16>, vector<32x32xbf16>, vector<304x32xf32> -> vector<304x32xf32>
    %c0_3 = arith.constant 0 : index
    %c0_4 = arith.constant 0 : index
    %18 = vector.load %arg3[%c0_3, %c0_4] : memref<1x32xf32, #tpu.memory_space<vmem>>, vector<1x32xf32>
    %19 = vector.broadcast %18 : vector<1x32xf32> to vector<304x32xf32>
    %20 = arith.addf %17, %19 : vector<304x32xf32>
    %c0_5 = arith.constant 0 : index
    %c0_6 = arith.constant 0 : index
    %21 = vector.load %arg4[%c0_5, %c0_6] : memref<304x32xf32, #tpu.memory_space<vmem>>, vector<304x32xf32>
    tpu.vector_store %arg4[%c0_5, %c0_6], %20 {strides = array<i32>} : memref<304x32xf32, #tpu.memory_space<vmem>>, vector<304x32xf32>,
    return
  }
  func.func @transform_0(%arg0: i32) -> (i32, i32) {
    %c0_i32 = arith.constant 0 : i32
    %c0_i32_0 = arith.constant 0 : i32
    return %arg0, %c0_i32 : i32, i32
  }
  func.func @transform_1(%arg0: i32) -> (i32, i32) {
    %c0_i32 = arith.constant 0 : i32
    %c0_i32_0 = arith.constant 0 : i32
    %c0_i32_1 = arith.constant 0 : i32
    return %c0_i32, %c0_i32_0 : i32, i32
  }
  func.func @transform_2(%arg0: i32) -> (i32, i32) {
    %c0_i32 = arith.constant 0 : i32
    %c0_i32_0 = arith.constant 0 : i32
    %c0_i32_1 = arith.constant 0 : i32
    return %c0_i32, %c0_i32_0 : i32, i32
  }
  func.func @transform_3(%arg0: i32) -> (i32, i32) {
    %c0_i32 = arith.constant 0 : i32
    %c0_i32_0 = arith.constant 0 : i32
    return %arg0, %c0_i32 : i32, i32
  }
}

</mosaic_0001>

<llo_original>
// kernel: tpu_custom_call.1
$region0: #{tpu_custom_call.1}
  #allocation0 [shape = 'u32[]', space=smem, size = 0x4, offset = 0x4, fixed_abs, tag = 'smem constant byte address 0x4 - core index']
  #allocation1 [shape = 'u32[144,128]{1,0:T(1,128)}', space=vmem, size = 0x12000, scoped, tag = 'internal scratch']
  %s0 = inlined_call_operand.vmem [shape: s32[608,3], index: 0, kind: input, shape index: {}]
  %s1 = inlined_call_operand.vmem [shape: bf16[32,32], index: 1, kind: input, shape index: {}]
  %s2 = inlined_call_operand.vmem [shape: f32[1,32], index: 2, kind: input, shape index: {}]
  %s3 = inlined_call_operand.vmem [shape: f32[608,32], index: 3, kind: output, shape index: {}]
  %s4 = sld [smem:[#allocation0]]
  $region45: #{tpu_custom_call.1} parent=0
    _
  %s6 = ssub.s32 1, %s4
  %s7 = scalar_select 0, %s6, %s4
  loop: start=0, step=1, limit=4
  $region2: #{tpu_custom_call.1} parent=0 // loop_pre_header
    _
  $region3: #{tpu_custom_call.1} parent=0 // loop_header
    %s9 = sphi 0, %s13
    %p10 = scmp.ge.s32.totalorder %s9, 4
    %s19 = sphi 0, %s21
    %s22 = sphi 0, %s19
    %s23 = sphi 0, %s22
    %s39 = sphi 0, %s23
    %s43 = sphi 0, %s43
    %s45 = sphi 0, %s43
    %s46 = sphi 0, %s45
    %s60 = sphi 0, %s46
    %s64 = sphi 0, %s64
    %s66 = sphi 0, %s64
    %s67 = sphi 0, %s66
    %s81 = sphi 0, %s67
    %s87 = sphi 0, %s89
    %s90 = sphi 0, %s87
    %s91 = sphi 0, %s90
    %s107 = sphi 0, %s91
  $region4: #{tpu_custom_call.1} parent=0 // loop_header_branch
    %12 = sbr.rel (%p10) target = $region8
  $region5: #{tpu_custom_call.1} parent=0 // loop_body
    %s14 = ssub.s32 %s9, 1
    %s15 = ssub.s32 %s9, 2
    %s16 = sadd.s32 %s9, 1
    %s17 = ssub.s32 %s9, %s16
    %p18 = scmp.eq.s32.totalorder %s17, 0
    %s20 = sadd.s32 %s19, 1
    %s21 = scalar_select %p18, %s19, %s20
    %p24 = pneg %p18
    %p25 = scmp.eq.s32.totalorder %s9, 1
    %p26 = por %p24, %p25
    %p27 = scmp.ne.s32.totalorder %s19, %s22
    %p28 = scmp.eq.s32.totalorder %s9, 0
    %p29 = por %p27, %p28
    %p30 = scmp.ne.s32.totalorder %s19, %s22
    %p31 = scmp.eq.s32.totalorder %s14, 1
    %p32 = por %p30, %p31
    %p33 = scmp.ne.s32.totalorder %s22, %s23
    %p34 = scmp.eq.s32.totalorder %s14, 0
    %p35 = por %p33, %p34
    %p36 = scmp.ne.s32.totalorder %s22, %s23
    %p37 = scmp.eq.s32.totalorder %s15, 1
    %p38 = por %p36, %p37
    %p40 = scmp.ne.s32.totalorder %s23, %s39
    %p41 = scmp.eq.s32.totalorder %s15, 0
    %p42 = por %p40, %p41
    %s44 = sadd.s32 %s43, 1
    %p47 = scmp.eq.s32.totalorder %s9, 1
    %p48 = scmp.ne.s32.totalorder %s43, %s45
    %p49 = scmp.eq.s32.totalorder %s9, 0
    %p50 = por %p48, %p49
    %p51 = scmp.ne.s32.totalorder %s43, %s45
    %p52 = scmp.eq.s32.totalorder %s14, 1
    %p53 = por %p51, %p52
    %p54 = scmp.ne.s32.totalorder %s45, %s46
    %p55 = scmp.eq.s32.totalorder %s14, 0
    %p56 = por %p54, %p55
    %p57 = scmp.ne.s32.totalorder %s45, %s46
    %p58 = scmp.eq.s32.totalorder %s15, 1
    %p59 = por %p57, %p58
    %p61 = scmp.ne.s32.totalorder %s46, %s60
    %p62 = scmp.eq.s32.totalorder %s15, 0
    %p63 = por %p61, %p62
    %s65 = sadd.s32 %s64, 1
    %p68 = scmp.eq.s32.totalorder %s9, 1
    %p69 = scmp.ne.s32.totalorder %s64, %s66
    %p70 = scmp.eq.s32.totalorder %s9, 0
    %p71 = por %p69, %p70
    %p72 = scmp.ne.s32.totalorder %s64, %s66
    %p73 = scmp.eq.s32.totalorder %s14, 1
    %p74 = por %p72, %p73
    %p75 = scmp.ne.s32.totalorder %s66, %s67
    %p76 = scmp.eq.s32.totalorder %s14, 0
    %p77 = por %p75, %p76
    %p78 = scmp.ne.s32.totalorder %s66, %s67
    %p79 = scmp.eq.s32.totalorder %s15, 1
    %p80 = por %p78, %p79
    %p82 = scmp.ne.s32.totalorder %s67, %s81
    %p83 = scmp.eq.s32.totalorder %s15, 0
    %p84 = por %p82, %p83
    %s85 = ssub.s32 %s9, %s16
    %p86 = scmp.eq.s32.totalorder %s85, 0
    %s88 = sadd.s32 %s87, 1
    %s89 = scalar_select %p86, %s87, %s88
    %p92 = pneg %p86
    %p93 = scmp.eq.s32.totalorder %s9, 1
    %p94 = por %p92, %p93
    %p95 = scmp.ne.s32.totalorder %s87, %s90
    %p96 = scmp.eq.s32.totalorder %s9, 0
    %p97 = por %p95, %p96
    %p98 = scmp.ne.s32.totalorder %s87, %s90
    %p99 = scmp.eq.s32.totalorder %s14, 1
    %p100 = por %p98, %p99
    %p101 = scmp.ne.s32.totalorder %s90, %s91
    %p102 = scmp.eq.s32.totalorder %s14, 0
    %p103 = por %p101, %p102
    %p104 = scmp.ne.s32.totalorder %s90, %s91
    %p105 = scmp.eq.s32.totalorder %s15, 1
    %p106 = por %p104, %p105
    %p108 = scmp.ne.s32.totalorder %s91, %s107
    %p109 = scmp.eq.s32.totalorder %s15, 0
    %p110 = por %p108, %p109
    %p111 = scmp.le.s32.totalorder 1, %s9
    %p112 = scmp.lt.s32.totalorder %s9, 3
    %p113 = pnand %p111, %p112
    %p114 = pneg %p113
    // Predicated region
    $region9: #{tpu_custom_call.1} parent=5 // pred_check
      _
    $region10: #{tpu_custom_call.1} parent=5 // pred_check_branch
      %116 = sbr.rel (%p113) target = $region12
    $region11: #{tpu_custom_call.1} parent=5 // pred_region
      %s117 = ssub.s32 %s9, 1
      // Predicated region
      $region13: #{tpu_custom_call.1} parent=11 // pred_check
        %p118 = pneg %p56
      $region14: #{tpu_custom_call.1} parent=11 // pred_check_branch
        %120 = sbr.rel (%p118) target = $region16
      $region15: #{tpu_custom_call.1} parent=11 // pred_region
        _
      $region16: #{tpu_custom_call.1} parent=11 // pred_fallthru
        _
      // Predicated region
      $region17: #{tpu_custom_call.1} parent=11 // pred_check
        %p121 = pneg %p77
      $region18: #{tpu_custom_call.1} parent=11 // pred_check_branch
        %123 = sbr.rel (%p121) target = $region20
      $region19: #{tpu_custom_call.1} parent=11 // pred_region
        _
      $region20: #{tpu_custom_call.1} parent=11 // pred_fallthru
        _
    $region12: #{tpu_custom_call.1} parent=5 // pred_fallthru
      _
    %p124 = scmp.lt.s32.totalorder %s9, 2
    // Predicated region
    $region21: #{tpu_custom_call.1} parent=5 // pred_check
      %p125 = pneg %p124
    $region22: #{tpu_custom_call.1} parent=5 // pred_check_branch
      %127 = sbr.rel (%p125) target = $region24
    $region23: #{tpu_custom_call.1} parent=5 // pred_region
      // Predicated region
      $region25: #{tpu_custom_call.1} parent=23 // pred_check
        %p128 = pneg %p29
      $region26: #{tpu_custom_call.1} parent=23 // pred_check_branch
        %130 = sbr.rel (%p128) target = $region28
      $region27: #{tpu_custom_call.1} parent=23 // pred_region
        %s131 = smul.u32 38, %s9
        %p132 = scmp.lt.s32.totalorder %s131, 75
        %s133 = scalar_select %p132, %s131, 75
        %s134 = smul.addr %s133, 8
        %s135 = scalar_lea.vmem %s0, %s134
        %s136 = smul.u32 38, %s9
      $region28: #{tpu_custom_call.1} parent=23 // pred_fallthru
        _
    $region24: #{tpu_custom_call.1} parent=5 // pred_fallthru
      _
    %p137 = scmp.le.s32.totalorder 1, %s9
    %p138 = scmp.lt.s32.totalorder %s9, 3
    %p139 = pnand %p137, %p138
    %p140 = pneg %p139
    // Predicated region
    $region29: #{tpu_custom_call.1} parent=5 // pred_check
      _
    $region30: #{tpu_custom_call.1} parent=5 // pred_check_branch
      %142 = sbr.rel (%p139) target = $region32
    $region31: #{tpu_custom_call.1} parent=5 // pred_region
      %s143 = ssub.s32 %s9, 1
      %s144 = smul.u32 38, %s14
      %p145 = scmp.lt.s32.totalorder %s144, 75
      %s146 = scalar_select %p145, %s144, 75
      %s147 = smul.addr %s146, 8
      %s148 = scalar_lea.vmem %s0, %s147
      %p149 = pneg %p35
      %p150 = pneg %p32
      %p151 = pneg %p56
      %p152 = pneg %p53
      %p153 = pneg %p77
      %p154 = pneg %p74
      %p155 = pneg %p103
      %p156 = pneg %p100
      %s157 = smul.u32 38, %s14
      %p158 = scmp.lt.s32.totalorder %s157, 75
      %s159 = scalar_select %p158, %s157, 75
      %s160 = smul.addr %s159, 8
      %s161 = scalar_lea.vmem %s3, %s160
      %s162 = smul.u32 38, %s14
      %p163 = scmp.lt.s32.totalorder %s162, 75
      %s164 = scalar_select %p163, %s162, 75
      %s165 = smul.addr %s164, 8
      %s166 = scalar_lea.vmem %s0, %s165
      %s167 = smul.u32 38, %s14
      %s168 = smul.u32 38, %s14
      %p169 = scmp.lt.s32.totalorder %s168, 75
      %s170 = scalar_select %p169, %s168, 75
      %s171 = smul.addr %s170, 8
      %s172 = scalar_lea.vmem %s3, %s171
      %s173 = smul.u32 38, %s14
      %v175 = vlaneseq
      %v176 = vand.u32 %v175, 127
      %v177 = vld [vmem:[%s166] sm:$0xff]
      %v178 = vld [vmem:[%s166 + $0x8] sm:$0xff]
      %v179 = vld [vmem:[%s166 + $0x10] sm:$0xff]
      %v180 = vld [vmem:[%s166 + $0x18] sm:$0xff]
      %v181 = vld [vmem:[%s166 + $0x20] sm:$0xff]
      %v182 = vld [vmem:[%s166 + $0x28] sm:$0xff]
      %v183 = vld [vmem:[%s166 + $0x30] sm:$0xff]
      %v184 = vld [vmem:[%s166 + $0x38] sm:$0xff]
      %v185 = vld [vmem:[%s166 + $0x40] sm:$0xff]
      %v186 = vld [vmem:[%s166 + $0x48] sm:$0xff]
      %v187 = vld [vmem:[%s166 + $0x50] sm:$0xff]
      %v188 = vld [vmem:[%s166 + $0x58] sm:$0xff]
      %v189 = vld [vmem:[%s166 + $0x60] sm:$0xff]
      %v190 = vld [vmem:[%s166 + $0x68] sm:$0xff]
      %v191 = vld [vmem:[%s166 + $0x70] sm:$0xff]
      %v192 = vld [vmem:[%s166 + $0x78] sm:$0xff]
      %v193 = vld [vmem:[%s166 + $0x80] sm:$0xff]
      %v194 = vld [vmem:[%s166 + $0x88] sm:$0xff]
      %v195 = vld [vmem:[%s166 + $0x90] sm:$0xff]
      %v196 = vld [vmem:[%s166 + $0x98] sm:$0xff]
      %v197 = vld [vmem:[%s166 + $0xa0] sm:$0xff]
      %v198 = vld [vmem:[%s166 + $0xa8] sm:$0xff]
      %v199 = vld [vmem:[%s166 + $0xb0] sm:$0xff]
      %v200 = vld [vmem:[%s166 + $0xb8] sm:$0xff]
      %v201 = vld [vmem:[%s166 + $0xc0] sm:$0xff]
      %v202 = vld [vmem:[%s166 + $0xc8] sm:$0xff]
      %v203 = vld [vmem:[%s166 + $0xd0] sm:$0xff]
      %v204 = vld [vmem:[%s166 + $0xd8] sm:$0xff]
      %v205 = vld [vmem:[%s166 + $0xe0] sm:$0xff]
      %v206 = vld [vmem:[%s166 + $0xe8] sm:$0xff]
      %v207 = vld [vmem:[%s166 + $0xf0] sm:$0xff]
      %v208 = vld [vmem:[%s166 + $0xf8] sm:$0xff]
      %v209 = vld [vmem:[%s166 + $0x100] sm:$0xff]
      %v210 = vld [vmem:[%s166 + $0x108] sm:$0xff]
      %v211 = vld [vmem:[%s166 + $0x110] sm:$0xff]
      %v212 = vld [vmem:[%s166 + $0x118] sm:$0xff]
      %v213 = vld [vmem:[%s166 + $0x120] sm:$0xff]
      %v214 = vld [vmem:[%s166 + $0x128] sm:$0xff]
      %215 = vset.pattern.permute.xlu0 0
      %216 = vperm.xlu0 %215, %v177
      %v217 = vpop.permute.xlu0 %216
      %218 = vset.pattern.permute.xlu0 0
      %219 = vperm.xlu0 %218, %v178
      %v220 = vpop.permute.xlu0 %219
      %221 = vset.pattern.permute.xlu0 0
      %222 = vperm.xlu0 %221, %v179
      %v223 = vpop.permute.xlu0 %222
      %224 = vset.pattern.permute.xlu0 0
      %225 = vperm.xlu0 %224, %v180
      %v226 = vpop.permute.xlu0 %225
      %227 = vset.pattern.permute.xlu0 0
      %228 = vperm.xlu0 %227, %v181
      %v229 = vpop.permute.xlu0 %228
      %230 = vset.pattern.permute.xlu0 0
      %231 = vperm.xlu0 %230, %v182
      %v232 = vpop.permute.xlu0 %231
      %233 = vset.pattern.permute.xlu0 0
      %234 = vperm.xlu0 %233, %v183
      %v235 = vpop.permute.xlu0 %234
      %236 = vset.pattern.permute.xlu0 0
      %237 = vperm.xlu0 %236, %v184
      %v238 = vpop.permute.xlu0 %237
      %239 = vset.pattern.permute.xlu0 0
      %240 = vperm.xlu0 %239, %v185
      %v241 = vpop.permute.xlu0 %240
      %242 = vset.pattern.permute.xlu0 0
      %243 = vperm.xlu0 %242, %v186
      %v244 = vpop.permute.xlu0 %243
      %245 = vset.pattern.permute.xlu0 0
      %246 = vperm.xlu0 %245, %v187
      %v247 = vpop.permute.xlu0 %246
      %248 = vset.pattern.permute.xlu0 0
      %249 = vperm.xlu0 %248, %v188
      %v250 = vpop.permute.xlu0 %249
      %251 = vset.pattern.permute.xlu0 0
      %252 = vperm.xlu0 %251, %v189
      %v253 = vpop.permute.xlu0 %252
      %254 = vset.pattern.permute.xlu0 0
      %255 = vperm.xlu0 %254, %v190
      %v256 = vpop.permute.xlu0 %255
      %257 = vset.pattern.permute.xlu0 0
      %258 = vperm.xlu0 %257, %v191
      %v259 = vpop.permute.xlu0 %258
      %260 = vset.pattern.permute.xlu0 0
      %261 = vperm.xlu0 %260, %v192
      %v262 = vpop.permute.xlu0 %261
      %263 = vset.pattern.permute.xlu0 0
      %264 = vperm.xlu0 %263, %v193
      %v265 = vpop.permute.xlu0 %264
      %266 = vset.pattern.permute.xlu0 0
      %267 = vperm.xlu0 %266, %v194
      %v268 = vpop.permute.xlu0 %267
      %269 = vset.pattern.permute.xlu0 0
      %270 = vperm.xlu0 %269, %v195
      %v271 = vpop.permute.xlu0 %270
      %272 = vset.pattern.permute.xlu0 0
      %273 = vperm.xlu0 %272, %v196
      %v274 = vpop.permute.xlu0 %273
      %275 = vset.pattern.permute.xlu0 0
      %276 = vperm.xlu0 %275, %v197
      %v277 = vpop.permute.xlu0 %276
      %278 = vset.pattern.permute.xlu0 0
      %279 = vperm.xlu0 %278, %v198
      %v280 = vpop.permute.xlu0 %279
      %281 = vset.pattern.permute.xlu0 0
      %282 = vperm.xlu0 %281, %v199
      %v283 = vpop.permute.xlu0 %282
      %284 = vset.pattern.permute.xlu0 0
      %285 = vperm.xlu0 %284, %v200
      %v286 = vpop.permute.xlu0 %285
      %287 = vset.pattern.permute.xlu0 0
      %288 = vperm.xlu0 %287, %v201
      %v289 = vpop.permute.xlu0 %288
      %290 = vset.pattern.permute.xlu0 0
      %291 = vperm.xlu0 %290, %v202
      %v292 = vpop.permute.xlu0 %291
      %293 = vset.pattern.permute.xlu0 0
      %294 = vperm.xlu0 %293, %v203
      %v295 = vpop.permute.xlu0 %294
      %296 = vset.pattern.permute.xlu0 0
      %297 = vperm.xlu0 %296, %v204
      %v298 = vpop.permute.xlu0 %297
      %299 = vset.pattern.permute.xlu0 0
      %300 = vperm.xlu0 %299, %v205
      %v301 = vpop.permute.xlu0 %300
      %302 = vset.pattern.permute.xlu0 0
      %303 = vperm.xlu0 %302, %v206
      %v304 = vpop.permute.xlu0 %303
      %305 = vset.pattern.permute.xlu0 0
      %306 = vperm.xlu0 %305, %v207
      %v307 = vpop.permute.xlu0 %306
      %308 = vset.pattern.permute.xlu0 0
      %309 = vperm.xlu0 %308, %v208
      %v310 = vpop.permute.xlu0 %309
      %311 = vset.pattern.permute.xlu0 0
      %312 = vperm.xlu0 %311, %v209
      %v313 = vpop.permute.xlu0 %312
      %314 = vset.pattern.permute.xlu0 0
      %315 = vperm.xlu0 %314, %v210
      %v316 = vpop.permute.xlu0 %315
      %317 = vset.pattern.permute.xlu0 0
      %318 = vperm.xlu0 %317, %v211
      %v319 = vpop.permute.xlu0 %318
      %320 = vset.pattern.permute.xlu0 0
      %321 = vperm.xlu0 %320, %v212
      %v322 = vpop.permute.xlu0 %321
      %323 = vset.pattern.permute.xlu0 0
      %324 = vperm.xlu0 %323, %v213
      %v325 = vpop.permute.xlu0 %324
      %326 = vset.pattern.permute.xlu0 0
      %327 = vperm.xlu0 %326, %v214
      %v328 = vpop.permute.xlu0 %327
      %vm329 = vcmp.eq.s32.totalorder %v176, %v217
      %vm330 = vcmp.eq.s32.totalorder %v176, %v220
      %vm331 = vcmp.eq.s32.totalorder %v176, %v223
      %vm332 = vcmp.eq.s32.totalorder %v176, %v226
      %vm333 = vcmp.eq.s32.totalorder %v176, %v229
      %vm334 = vcmp.eq.s32.totalorder %v176, %v232
      %vm335 = vcmp.eq.s32.totalorder %v176, %v235
      %vm336 = vcmp.eq.s32.totalorder %v176, %v238
      %vm337 = vcmp.eq.s32.totalorder %v176, %v241
      %vm338 = vcmp.eq.s32.totalorder %v176, %v244
      %vm339 = vcmp.eq.s32.totalorder %v176, %v247
      %vm340 = vcmp.eq.s32.totalorder %v176, %v250
      %vm341 = vcmp.eq.s32.totalorder %v176, %v253
      %vm342 = vcmp.eq.s32.totalorder %v176, %v256
      %vm343 = vcmp.eq.s32.totalorder %v176, %v259
      %vm344 = vcmp.eq.s32.totalorder %v176, %v262
      %vm345 = vcmp.eq.s32.totalorder %v176, %v265
      %vm346 = vcmp.eq.s32.totalorder %v176, %v268
      %vm347 = vcmp.eq.s32.totalorder %v176, %v271
      %vm348 = vcmp.eq.s32.totalorder %v176, %v274
      %vm349 = vcmp.eq.s32.totalorder %v176, %v277
      %vm350 = vcmp.eq.s32.totalorder %v176, %v280
      %vm351 = vcmp.eq.s32.totalorder %v176, %v283
      %vm352 = vcmp.eq.s32.totalorder %v176, %v286
      %vm353 = vcmp.eq.s32.totalorder %v176, %v289
      %vm354 = vcmp.eq.s32.totalorder %v176, %v292
      %vm355 = vcmp.eq.s32.totalorder %v176, %v295
      %vm356 = vcmp.eq.s32.totalorder %v176, %v298
      %vm357 = vcmp.eq.s32.totalorder %v176, %v301
      %vm358 = vcmp.eq.s32.totalorder %v176, %v304
      %vm359 = vcmp.eq.s32.totalorder %v176, %v307
      %vm360 = vcmp.eq.s32.totalorder %v176, %v310
      %vm361 = vcmp.eq.s32.totalorder %v176, %v313
      %vm362 = vcmp.eq.s32.totalorder %v176, %v316
      %vm363 = vcmp.eq.s32.totalorder %v176, %v319
      %vm364 = vcmp.eq.s32.totalorder %v176, %v322
      %vm365 = vcmp.eq.s32.totalorder %v176, %v325
      %vm366 = vcmp.eq.s32.totalorder %v176, %v328
      %367 = vset.pattern.permute.xlu0 1
      %368 = vperm.xlu0 %367, %v177
      %v369 = vpop.permute.xlu0 %368
      %370 = vset.pattern.permute.xlu0 1
      %371 = vperm.xlu0 %370, %v178
      %v372 = vpop.permute.xlu0 %371
      %373 = vset.pattern.permute.xlu0 1
      %374 = vperm.xlu0 %373, %v179
      %v375 = vpop.permute.xlu0 %374
      %376 = vset.pattern.permute.xlu0 1
      %377 = vperm.xlu0 %376, %v180
      %v378 = vpop.permute.xlu0 %377
      %379 = vset.pattern.permute.xlu0 1
      %380 = vperm.xlu0 %379, %v181
      %v381 = vpop.permute.xlu0 %380
      %382 = vset.pattern.permute.xlu0 1
      %383 = vperm.xlu0 %382, %v182
      %v384 = vpop.permute.xlu0 %383
      %385 = vset.pattern.permute.xlu0 1
      %386 = vperm.xlu0 %385, %v183
      %v387 = vpop.permute.xlu0 %386
      %388 = vset.pattern.permute.xlu0 1
      %389 = vperm.xlu0 %388, %v184
      %v390 = vpop.permute.xlu0 %389
      %391 = vset.pattern.permute.xlu0 1
      %392 = vperm.xlu0 %391, %v185
      %v393 = vpop.permute.xlu0 %392
      %394 = vset.pattern.permute.xlu0 1
      %395 = vperm.xlu0 %394, %v186
      %v396 = vpop.permute.xlu0 %395
      %397 = vset.pattern.permute.xlu0 1
      %398 = vperm.xlu0 %397, %v187
      %v399 = vpop.permute.xlu0 %398
      %400 = vset.pattern.permute.xlu0 1
      %401 = vperm.xlu0 %400, %v188
      %v402 = vpop.permute.xlu0 %401
      %403 = vset.pattern.permute.xlu0 1
      %404 = vperm.xlu0 %403, %v189
      %v405 = vpop.permute.xlu0 %404
      %406 = vset.pattern.permute.xlu0 1
      %407 = vperm.xlu0 %406, %v190
      %v408 = vpop.permute.xlu0 %407
      %409 = vset.pattern.permute.xlu0 1
      %410 = vperm.xlu0 %409, %v191
      %v411 = vpop.permute.xlu0 %410
      %412 = vset.pattern.permute.xlu0 1
      %413 = vperm.xlu0 %412, %v192
      %v414 = vpop.permute.xlu0 %413
      %415 = vset.pattern.permute.xlu0 1
      %416 = vperm.xlu0 %415, %v193
      %v417 = vpop.permute.xlu0 %416
      %418 = vset.pattern.permute.xlu0 1
      %419 = vperm.xlu0 %418, %v194
      %v420 = vpop.permute.xlu0 %419
      %421 = vset.pattern.permute.xlu0 1
      %422 = vperm.xlu0 %421, %v195
      %v423 = vpop.permute.xlu0 %422
      %424 = vset.pattern.permute.xlu0 1
      %425 = vperm.xlu0 %424, %v196
      %v426 = vpop.permute.xlu0 %425
      %427 = vset.pattern.permute.xlu0 1
      %428 = vperm.xlu0 %427, %v197
      %v429 = vpop.permute.xlu0 %428
      %430 = vset.pattern.permute.xlu0 1
      %431 = vperm.xlu0 %430, %v198
      %v432 = vpop.permute.xlu0 %431
      %433 = vset.pattern.permute.xlu0 1
      %434 = vperm.xlu0 %433, %v199
      %v435 = vpop.permute.xlu0 %434
      %436 = vset.pattern.permute.xlu0 1
      %437 = vperm.xlu0 %436, %v200
      %v438 = vpop.permute.xlu0 %437
      %439 = vset.pattern.permute.xlu0 1
      %440 = vperm.xlu0 %439, %v201
      %v441 = vpop.permute.xlu0 %440
      %442 = vset.pattern.permute.xlu0 1
      %443 = vperm.xlu0 %442, %v202
      %v444 = vpop.permute.xlu0 %443
      %445 = vset.pattern.permute.xlu0 1
      %446 = vperm.xlu0 %445, %v203
      %v447 = vpop.permute.xlu0 %446
      %448 = vset.pattern.permute.xlu0 1
      %449 = vperm.xlu0 %448, %v204
      %v450 = vpop.permute.xlu0 %449
      %451 = vset.pattern.permute.xlu0 1
      %452 = vperm.xlu0 %451, %v205
      %v453 = vpop.permute.xlu0 %452
      %454 = vset.pattern.permute.xlu0 1
      %455 = vperm.xlu0 %454, %v206
      %v456 = vpop.permute.xlu0 %455
      %457 = vset.pattern.permute.xlu0 1
      %458 = vperm.xlu0 %457, %v207
      %v459 = vpop.permute.xlu0 %458
      %460 = vset.pattern.permute.xlu0 1
      %461 = vperm.xlu0 %460, %v208
      %v462 = vpop.permute.xlu0 %461
      %463 = vset.pattern.permute.xlu0 1
      %464 = vperm.xlu0 %463, %v209
      %v465 = vpop.permute.xlu0 %464
      %466 = vset.pattern.permute.xlu0 1
      %467 = vperm.xlu0 %466, %v210
      %v468 = vpop.permute.xlu0 %467
      %469 = vset.pattern.permute.xlu0 1
      %470 = vperm.xlu0 %469, %v211
      %v471 = vpop.permute.xlu0 %470
      %472 = vset.pattern.permute.xlu0 1
      %473 = vperm.xlu0 %472, %v212
      %v474 = vpop.permute.xlu0 %473
      %475 = vset.pattern.permute.xlu0 1
      %476 = vperm.xlu0 %475, %v213
      %v477 = vpop.permute.xlu0 %476
      %478 = vset.pattern.permute.xlu0 1
      %479 = vperm.xlu0 %478, %v214
      %v480 = vpop.permute.xlu0 %479
      %vm481 = vcmp.eq.s32.totalorder %v176, %v369
      %vm482 = vcmp.eq.s32.totalorder %v176, %v372
      %vm483 = vcmp.eq.s32.totalorder %v176, %v375
      %vm484 = vcmp.eq.s32.totalorder %v176, %v378
      %vm485 = vcmp.eq.s32.totalorder %v176, %v381
      %vm486 = vcmp.eq.s32.totalorder %v176, %v384
      %vm487 = vcmp.eq.s32.totalorder %v176, %v387
      %vm488 = vcmp.eq.s32.totalorder %v176, %v390
      %vm489 = vcmp.eq.s32.totalorder %v176, %v393
      %vm490 = vcmp.eq.s32.totalorder %v176, %v396
      %vm491 = vcmp.eq.s32.totalorder %v176, %v399
      %vm492 = vcmp.eq.s32.totalorder %v176, %v402
      %vm493 = vcmp.eq.s32.totalorder %v176, %v405
      %vm494 = vcmp.eq.s32.totalorder %v176, %v408
      %vm495 = vcmp.eq.s32.totalorder %v176, %v411
      %vm496 = vcmp.eq.s32.totalorder %v176, %v414
      %vm497 = vcmp.eq.s32.totalorder %v176, %v417
      %vm498 = vcmp.eq.s32.totalorder %v176, %v420
      %vm499 = vcmp.eq.s32.totalorder %v176, %v423
      %vm500 = vcmp.eq.s32.totalorder %v176, %v426
      %vm501 = vcmp.eq.s32.totalorder %v176, %v429
      %vm502 = vcmp.eq.s32.totalorder %v176, %v432
      %vm503 = vcmp.eq.s32.totalorder %v176, %v435
      %vm504 = vcmp.eq.s32.totalorder %v176, %v438
      %vm505 = vcmp.eq.s32.totalorder %v176, %v441
      %vm506 = vcmp.eq.s32.totalorder %v176, %v444
      %vm507 = vcmp.eq.s32.totalorder %v176, %v447
      %vm508 = vcmp.eq.s32.totalorder %v176, %v450
      %vm509 = vcmp.eq.s32.totalorder %v176, %v453
      %vm510 = vcmp.eq.s32.totalorder %v176, %v456
      %vm511 = vcmp.eq.s32.totalorder %v176, %v459
      %vm512 = vcmp.eq.s32.totalorder %v176, %v462
      %vm513 = vcmp.eq.s32.totalorder %v176, %v465
      %vm514 = vcmp.eq.s32.totalorder %v176, %v468
      %vm515 = vcmp.eq.s32.totalorder %v176, %v471
      %vm516 = vcmp.eq.s32.totalorder %v176, %v474
      %vm517 = vcmp.eq.s32.totalorder %v176, %v477
      %vm518 = vcmp.eq.s32.totalorder %v176, %v480
      %vm519 = vmor %vm329, %vm481
      %vm520 = vmor %vm330, %vm482
      %vm521 = vmor %vm331, %vm483
      %vm522 = vmor %vm332, %vm484
      %vm523 = vmor %vm333, %vm485
      %vm524 = vmor %vm334, %vm486
      %vm525 = vmor %vm335, %vm487
      %vm526 = vmor %vm336, %vm488
      %vm527 = vmor %vm337, %vm489
      %vm528 = vmor %vm338, %vm490
      %vm529 = vmor %vm339, %vm491
      %vm530 = vmor %vm340, %vm492
      %vm531 = vmor %vm341, %vm493
      %vm532 = vmor %vm342, %vm494
      %vm533 = vmor %vm343, %vm495
      %vm534 = vmor %vm344, %vm496
      %vm535 = vmor %vm345, %vm497
      %vm536 = vmor %vm346, %vm498
      %vm537 = vmor %vm347, %vm499
      %vm538 = vmor %vm348, %vm500
      %vm539 = vmor %vm349, %vm501
      %vm540 = vmor %vm350, %vm502
      %vm541 = vmor %vm351, %vm503
      %vm542 = vmor %vm352, %vm504
      %vm543 = vmor %vm353, %vm505
      %vm544 = vmor %vm354, %vm506
      %vm545 = vmor %vm355, %vm507
      %vm546 = vmor %vm356, %vm508
      %vm547 = vmor %vm357, %vm509
      %vm548 = vmor %vm358, %vm510
      %vm549 = vmor %vm359, %vm511
      %vm550 = vmor %vm360, %vm512
      %vm551 = vmor %vm361, %vm513
      %vm552 = vmor %vm362, %vm514
      %vm553 = vmor %vm363, %vm515
      %vm554 = vmor %vm364, %vm516
      %vm555 = vmor %vm365, %vm517
      %vm556 = vmor %vm366, %vm518
      %557 = vset.pattern.permute.xlu0 2
      %558 = vperm.xlu0 %557, %v177
      %v559 = vpop.permute.xlu0 %558
      %560 = vset.pattern.permute.xlu0 2
      %561 = vperm.xlu0 %560, %v178
      %v562 = vpop.permute.xlu0 %561
      %563 = vset.pattern.permute.xlu0 2
      %564 = vperm.xlu0 %563, %v179
      %v565 = vpop.permute.xlu0 %564
      %566 = vset.pattern.permute.xlu0 2
      %567 = vperm.xlu0 %566, %v180
      %v568 = vpop.permute.xlu0 %567
      %569 = vset.pattern.permute.xlu0 2
      %570 = vperm.xlu0 %569, %v181
      %v571 = vpop.permute.xlu0 %570
      %572 = vset.pattern.permute.xlu0 2
      %573 = vperm.xlu0 %572, %v182
      %v574 = vpop.permute.xlu0 %573
      %575 = vset.pattern.permute.xlu0 2
      %576 = vperm.xlu0 %575, %v183
      %v577 = vpop.permute.xlu0 %576
      %578 = vset.pattern.permute.xlu0 2
      %579 = vperm.xlu0 %578, %v184
      %v580 = vpop.permute.xlu0 %579
      %581 = vset.pattern.permute.xlu0 2
      %582 = vperm.xlu0 %581, %v185
      %v583 = vpop.permute.xlu0 %582
      %584 = vset.pattern.permute.xlu0 2
      %585 = vperm.xlu0 %584, %v186
      %v586 = vpop.permute.xlu0 %585
      %587 = vset.pattern.permute.xlu0 2
      %588 = vperm.xlu0 %587, %v187
      %v589 = vpop.permute.xlu0 %588
      %590 = vset.pattern.permute.xlu0 2
      %591 = vperm.xlu0 %590, %v188
      %v592 = vpop.permute.xlu0 %591
      %593 = vset.pattern.permute.xlu0 2
      %594 = vperm.xlu0 %593, %v189
      %v595 = vpop.permute.xlu0 %594
      %596 = vset.pattern.permute.xlu0 2
      %597 = vperm.xlu0 %596, %v190
      %v598 = vpop.permute.xlu0 %597
      %599 = vset.pattern.permute.xlu0 2
      %600 = vperm.xlu0 %599, %v191
      %v601 = vpop.permute.xlu0 %600
      %602 = vset.pattern.permute.xlu0 2
      %603 = vperm.xlu0 %602, %v192
      %v604 = vpop.permute.xlu0 %603
      %605 = vset.pattern.permute.xlu0 2
      %606 = vperm.xlu0 %605, %v193
      %v607 = vpop.permute.xlu0 %606
      %608 = vset.pattern.permute.xlu0 2
      %609 = vperm.xlu0 %608, %v194
      %v610 = vpop.permute.xlu0 %609
      %611 = vset.pattern.permute.xlu0 2
      %612 = vperm.xlu0 %611, %v195
      %v613 = vpop.permute.xlu0 %612
      %614 = vset.pattern.permute.xlu0 2
      %615 = vperm.xlu0 %614, %v196
      %v616 = vpop.permute.xlu0 %615
      %617 = vset.pattern.permute.xlu0 2
      %618 = vperm.xlu0 %617, %v197
      %v619 = vpop.permute.xlu0 %618
      %620 = vset.pattern.permute.xlu0 2
      %621 = vperm.xlu0 %620, %v198
      %v622 = vpop.permute.xlu0 %621
      %623 = vset.pattern.permute.xlu0 2
      %624 = vperm.xlu0 %623, %v199
      %v625 = vpop.permute.xlu0 %624
      %626 = vset.pattern.permute.xlu0 2
      %627 = vperm.xlu0 %626, %v200
      %v628 = vpop.permute.xlu0 %627
      %629 = vset.pattern.permute.xlu0 2
      %630 = vperm.xlu0 %629, %v201
      %v631 = vpop.permute.xlu0 %630
      %632 = vset.pattern.permute.xlu0 2
      %633 = vperm.xlu0 %632, %v202
      %v634 = vpop.permute.xlu0 %633
      %635 = vset.pattern.permute.xlu0 2
      %636 = vperm.xlu0 %635, %v203
      %v637 = vpop.permute.xlu0 %636
      %638 = vset.pattern.permute.xlu0 2
      %639 = vperm.xlu0 %638, %v204
      %v640 = vpop.permute.xlu0 %639
      %641 = vset.pattern.permute.xlu0 2
      %642 = vperm.xlu0 %641, %v205
      %v643 = vpop.permute.xlu0 %642
      %644 = vset.pattern.permute.xlu0 2
      %645 = vperm.xlu0 %644, %v206
      %v646 = vpop.permute.xlu0 %645
      %647 = vset.pattern.permute.xlu0 2
      %648 = vperm.xlu0 %647, %v207
      %v649 = vpop.permute.xlu0 %648
      %650 = vset.pattern.permute.xlu0 2
      %651 = vperm.xlu0 %650, %v208
      %v652 = vpop.permute.xlu0 %651
      %653 = vset.pattern.permute.xlu0 2
      %654 = vperm.xlu0 %653, %v209
      %v655 = vpop.permute.xlu0 %654
      %656 = vset.pattern.permute.xlu0 2
      %657 = vperm.xlu0 %656, %v210
      %v658 = vpop.permute.xlu0 %657
      %659 = vset.pattern.permute.xlu0 2
      %660 = vperm.xlu0 %659, %v211
      %v661 = vpop.permute.xlu0 %660
      %662 = vset.pattern.permute.xlu0 2
      %663 = vperm.xlu0 %662, %v212
      %v664 = vpop.permute.xlu0 %663
      %665 = vset.pattern.permute.xlu0 2
      %666 = vperm.xlu0 %665, %v213
      %v667 = vpop.permute.xlu0 %666
      %668 = vset.pattern.permute.xlu0 2
      %669 = vperm.xlu0 %668, %v214
      %v670 = vpop.permute.xlu0 %669
      %vm671 = vcmp.eq.s32.totalorder %v176, %v559
      %vm672 = vcmp.eq.s32.totalorder %v176, %v562
      %vm673 = vcmp.eq.s32.totalorder %v176, %v565
      %vm674 = vcmp.eq.s32.totalorder %v176, %v568
      %vm675 = vcmp.eq.s32.totalorder %v176, %v571
      %vm676 = vcmp.eq.s32.totalorder %v176, %v574
      %vm677 = vcmp.eq.s32.totalorder %v176, %v577
      %vm678 = vcmp.eq.s32.totalorder %v176, %v580
      %vm679 = vcmp.eq.s32.totalorder %v176, %v583
      %vm680 = vcmp.eq.s32.totalorder %v176, %v586
      %vm681 = vcmp.eq.s32.totalorder %v176, %v589
      %vm682 = vcmp.eq.s32.totalorder %v176, %v592
      %vm683 = vcmp.eq.s32.totalorder %v176, %v595
      %vm684 = vcmp.eq.s32.totalorder %v176, %v598
      %vm685 = vcmp.eq.s32.totalorder %v176, %v601
      %vm686 = vcmp.eq.s32.totalorder %v176, %v604
      %vm687 = vcmp.eq.s32.totalorder %v176, %v607
      %vm688 = vcmp.eq.s32.totalorder %v176, %v610
      %vm689 = vcmp.eq.s32.totalorder %v176, %v613
      %vm690 = vcmp.eq.s32.totalorder %v176, %v616
      %vm691 = vcmp.eq.s32.totalorder %v176, %v619
      %vm692 = vcmp.eq.s32.totalorder %v176, %v622
      %vm693 = vcmp.eq.s32.totalorder %v176, %v625
      %vm694 = vcmp.eq.s32.totalorder %v176, %v628
      %vm695 = vcmp.eq.s32.totalorder %v176, %v631
      %vm696 = vcmp.eq.s32.totalorder %v176, %v634
      %vm697 = vcmp.eq.s32.totalorder %v176, %v637
      %vm698 = vcmp.eq.s32.totalorder %v176, %v640
      %vm699 = vcmp.eq.s32.totalorder %v176, %v643
      %vm700 = vcmp.eq.s32.totalorder %v176, %v646
      %vm701 = vcmp.eq.s32.totalorder %v176, %v649
      %vm702 = vcmp.eq.s32.totalorder %v176, %v652
      %vm703 = vcmp.eq.s32.totalorder %v176, %v655
      %vm704 = vcmp.eq.s32.totalorder %v176, %v658
      %vm705 = vcmp.eq.s32.totalorder %v176, %v661
      %vm706 = vcmp.eq.s32.totalorder %v176, %v664
      %vm707 = vcmp.eq.s32.totalorder %v176, %v667
      %vm708 = vcmp.eq.s32.totalorder %v176, %v670
      %vm709 = vmor %vm519, %vm671
      %vm710 = vmor %vm520, %vm672
      %vm711 = vmor %vm521, %vm673
      %vm712 = vmor %vm522, %vm674
      %vm713 = vmor %vm523, %vm675
      %vm714 = vmor %vm524, %vm676
      %vm715 = vmor %vm525, %vm677
      %vm716 = vmor %vm526, %vm678
      %vm717 = vmor %vm527, %vm679
      %vm718 = vmor %vm528, %vm680
      %vm719 = vmor %vm529, %vm681
      %vm720 = vmor %vm530, %vm682
      %vm721 = vmor %vm531, %vm683
      %vm722 = vmor %vm532, %vm684
      %vm723 = vmor %vm533, %vm685
      %vm724 = vmor %vm534, %vm686
      %vm725 = vmor %vm535, %vm687
      %vm726 = vmor %vm536, %vm688
      %vm727 = vmor %vm537, %vm689
      %vm728 = vmor %vm538, %vm690
      %vm729 = vmor %vm539, %vm691
      %vm730 = vmor %vm540, %vm692
      %vm731 = vmor %vm541, %vm693
      %vm732 = vmor %vm542, %vm694
      %vm733 = vmor %vm543, %vm695
      %vm734 = vmor %vm544, %vm696
      %vm735 = vmor %vm545, %vm697
      %vm736 = vmor %vm546, %vm698
      %vm737 = vmor %vm547, %vm699
      %vm738 = vmor %vm548, %vm700
      %vm739 = vmor %vm549, %vm701
      %vm740 = vmor %vm550, %vm702
      %vm741 = vmor %vm551, %vm703
      %vm742 = vmor %vm552, %vm704
      %vm743 = vmor %vm553, %vm705
      %vm744 = vmor %vm554, %vm706
      %vm745 = vmor %vm555, %vm707
      %vm746 = vmor %vm556, %vm708
      %v747 = vsel %vm709, 1, 0
      %v748 = vsel %vm710, 1, 0
      %v749 = vsel %vm711, 1, 0
      %v750 = vsel %vm712, 1, 0
      %v751 = vsel %vm713, 1, 0
      %v752 = vsel %vm714, 1, 0
      %v753 = vsel %vm715, 1, 0
      %v754 = vsel %vm716, 1, 0
      %v755 = vsel %vm717, 1, 0
      %v756 = vsel %vm718, 1, 0
      %v757 = vsel %vm719, 1, 0
      %v758 = vsel %vm720, 1, 0
      %v759 = vsel %vm721, 1, 0
      %v760 = vsel %vm722, 1, 0
      %v761 = vsel %vm723, 1, 0
      %v762 = vsel %vm724, 1, 0
      %v763 = vsel %vm725, 1, 0
      %v764 = vsel %vm726, 1, 0
      %v765 = vsel %vm727, 1, 0
      %v766 = vsel %vm728, 1, 0
      %v767 = vsel %vm729, 1, 0
      %v768 = vsel %vm730, 1, 0
      %v769 = vsel %vm731, 1, 0
      %v770 = vsel %vm732, 1, 0
      %v771 = vsel %vm733, 1, 0
      %v772 = vsel %vm734, 1, 0
      %v773 = vsel %vm735, 1, 0
      %v774 = vsel %vm736, 1, 0
      %v775 = vsel %vm737, 1, 0
      %v776 = vsel %vm738, 1, 0
      %v777 = vsel %vm739, 1, 0
      %v778 = vsel %vm740, 1, 0
      %v779 = vsel %vm741, 1, 0
      %v780 = vsel %vm742, 1, 0
      %v781 = vsel %vm743, 1, 0
      %v782 = vsel %vm744, 1, 0
      %v783 = vsel %vm745, 1, 0
      %v784 = vsel %vm746, 1, 0
      %v785 = vcvt.s32.f32 %v747
      %v786 = vcvt.s32.f32 %v748
      %v787 = vcvt.s32.f32 %v749
      %v788 = vcvt.s32.f32 %v750
      %v789 = vcvt.s32.f32 %v751
      %v790 = vcvt.s32.f32 %v752
      %v791 = vcvt.s32.f32 %v753
      %v792 = vcvt.s32.f32 %v754
      %v793 = vcvt.s32.f32 %v755
      %v794 = vcvt.s32.f32 %v756
      %v795 = vcvt.s32.f32 %v757
      %v796 = vcvt.s32.f32 %v758
      %v797 = vcvt.s32.f32 %v759
      %v798 = vcvt.s32.f32 %v760
      %v799 = vcvt.s32.f32 %v761
      %v800 = vcvt.s32.f32 %v762
      %v801 = vcvt.s32.f32 %v763
      %v802 = vcvt.s32.f32 %v764
      %v803 = vcvt.s32.f32 %v765
      %v804 = vcvt.s32.f32 %v766
      %v805 = vcvt.s32.f32 %v767
      %v806 = vcvt.s32.f32 %v768
      %v807 = vcvt.s32.f32 %v769
      %v808 = vcvt.s32.f32 %v770
      %v809 = vcvt.s32.f32 %v771
      %v810 = vcvt.s32.f32 %v772
      %v811 = vcvt.s32.f32 %v773
      %v812 = vcvt.s32.f32 %v774
      %v813 = vcvt.s32.f32 %v775
      %v814 = vcvt.s32.f32 %v776
      %v815 = vcvt.s32.f32 %v777
      %v816 = vcvt.s32.f32 %v778
      %v817 = vcvt.s32.f32 %v779
      %v818 = vcvt.s32.f32 %v780
      %v819 = vcvt.s32.f32 %v781
      %v820 = vcvt.s32.f32 %v782
      %v821 = vcvt.s32.f32 %v783
      %v822 = vcvt.s32.f32 %v784
      %v823 = vpack.c.bf16 %v786, %v785
      %v824 = vpack.c.bf16 %v788, %v787
      %v825 = vpack.c.bf16 %v790, %v789
      %v826 = vpack.c.bf16 %v792, %v791
      %v827 = vpack.c.bf16 %v794, %v793
      %v828 = vpack.c.bf16 %v796, %v795
      %v829 = vpack.c.bf16 %v798, %v797
      %v830 = vpack.c.bf16 %v800, %v799
      %v831 = vpack.c.bf16 %v802, %v801
      %v832 = vpack.c.bf16 %v804, %v803
      %v833 = vpack.c.bf16 %v806, %v805
      %v834 = vpack.c.bf16 %v808, %v807
      %v835 = vpack.c.bf16 %v810, %v809
      %v836 = vpack.c.bf16 %v812, %v811
      %v837 = vpack.c.bf16 %v814, %v813
      %v838 = vpack.c.bf16 %v816, %v815
      %v839 = vpack.c.bf16 %v818, %v817
      %v840 = vpack.c.bf16 %v820, %v819
      %v841 = vpack.c.bf16 %v822, %v821
      %v842 = vld [vmem:[%s1] sm:$0xf]
      %v843 = vld [vmem:[%s1 + $0x4] sm:$0xf]
      %v844 = vld [vmem:[%s1 + $0x8] sm:$0xf]
      %v845 = vld [vmem:[%s1 + $0xc] sm:$0xf]
      %v846 = vld [vmem:[%s2] sm:$0x1]
      %v848 = vlaneseq
      %v849 = vshrl.u32 %v848, 7
      %v850 = vsub.s32 0, %v849
      %v851 = vrot.slane %v846, %v850
      %v857 = vunpack.c.l.b16 %v842
      %v858 = vunpack.c.l.b16 %v843
      %v859 = vunpack.c.l.b16 %v844
      %v860 = vunpack.c.l.b16 %v845
      %v861 = vpack.c.b16 %v858, %v857
      %v862 = vpack.c.b16 %v860, %v859
      %vm865 = vcmask 261120
      %v867 = vsel %vm865, %v823, 0
      %v870 = vsel %vm865, %v824, 0
      %v873 = vsel %vm865, %v825, 0
      %v876 = vsel %vm865, %v826, 0
      %v879 = vsel %vm865, %v827, 0
      %v882 = vsel %vm865, %v828, 0
      %v885 = vsel %vm865, %v829, 0
      %v888 = vsel %vm865, %v830, 0
      %v891 = vsel %vm865, %v831, 0
      %v894 = vsel %vm865, %v832, 0
      %v897 = vsel %vm865, %v833, 0
      %v900 = vsel %vm865, %v834, 0
      %v903 = vsel %vm865, %v835, 0
      %v906 = vsel %vm865, %v836, 0
      %v909 = vsel %vm865, %v837, 0
      %v912 = vsel %vm865, %v838, 0
      %v915 = vsel %vm865, %v839, 0
      %v918 = vsel %vm865, %v840, 0
      %v921 = vsel %vm865, %v841, 0
      %923 = vmatprep.subr.bf16.mxu0 0
      %924 = vmatpush1.bf16.msra.mxu0 %v861
      %925 = vmatprep.subr.bf16.mxu0 0
      %926 = vmatpush1.bf16.msra.mxu0 %v862
      %927 = vmatprep.subr.bf16.mxu0 0
      %928 = vmatpush1.bf16.msra.mxu0 0
      %929 = vmatprep.subr.bf16.mxu0 0
      %930 = vmatpush1.bf16.msra.mxu0 0
      %931 = vmatprep.subr.bf16.mxu0 0
      %932 = vmatpush1.bf16.msra.mxu0 0
      %933 = vmatprep.subr.bf16.mxu0 0
      %934 = vmatpush1.bf16.msra.mxu0 0
      %935 = vmatprep.subr.bf16.mxu0 0
      %936 = vmatpush1.bf16.msra.mxu0 0
      %937 = vmatprep.subr.bf16.mxu0 0
      %938 = vmatpush1.bf16.msra.mxu0 0
      %939 = vmatprep.subr.bf16.mxu0 0
      %940 = vmatpush1.bf16.msra.mxu0 0
      %941 = vmatprep.subr.bf16.mxu0 0
      %942 = vmatpush1.bf16.msra.mxu0 0
      %943 = vmatprep.subr.bf16.mxu0 0
      %944 = vmatpush1.bf16.msra.mxu0 0
      %945 = vmatprep.subr.bf16.mxu0 0
      %946 = vmatpush1.bf16.msra.mxu0 0
      %947 = vmatprep.subr.bf16.mxu0 0
      %948 = vmatpush1.bf16.msra.mxu0 0
      %949 = vmatprep.subr.bf16.mxu0 0
      %950 = vmatpush1.bf16.msra.mxu0 0
      %951 = vmatprep.subr.bf16.mxu0 0
      %952 = vmatpush1.bf16.msra.mxu0 0
      %953 = vmatprep.subr.bf16.mxu0 0
      %954 = vmatpush1.bf16.msra.mxu0 0
      %955 = vmatprep.mubr.bf16.mxu0 0
      %956 = vmatmul.mubr.bf16.gmra.mrb[0].mxu0 %v867
      %v957 = vpop.f32.mrb[0].mxu0
      %v958 = vadd.f32 %v851, %v957
      %v959 = vpop.f32.mrb[0].mxu0
      %v960 = vpop.f32.mrb[0].mxu0
      %v961 = vadd.f32 %v851, %v960
      %v962 = vpop.f32.mrb[0].mxu0
      %963 = vmatprep.mubr.bf16.mxu0 0
      %964 = vmatmul.mubr.bf16.gmra.mrb[0].mxu0 %v870
      %v965 = vpop.f32.mrb[0].mxu0
      %v966 = vadd.f32 %v851, %v965
      %v967 = vpop.f32.mrb[0].mxu0
      %v968 = vpop.f32.mrb[0].mxu0
      %v969 = vadd.f32 %v851, %v968
      %v970 = vpop.f32.mrb[0].mxu0
      %971 = vmatprep.mubr.bf16.mxu0 0
      %972 = vmatmul.mubr.bf16.gmra.mrb[0].mxu0 %v873
      %v973 = vpop.f32.mrb[0].mxu0
      %v974 = vadd.f32 %v851, %v973
      %v975 = vpop.f32.mrb[0].mxu0
      %v976 = vpop.f32.mrb[0].mxu0
      %v977 = vadd.f32 %v851, %v976
      %v978 = vpop.f32.mrb[0].mxu0
      %979 = vmatprep.mubr.bf16.mxu0 0
      %980 = vmatmul.mubr.bf16.gmra.mrb[0].mxu0 %v876
      %v981 = vpop.f32.mrb[0].mxu0
      %v982 = vadd.f32 %v851, %v981
      %v983 = vpop.f32.mrb[0].mxu0
      %v984 = vpop.f32.mrb[0].mxu0
      %v985 = vadd.f32 %v851, %v984
      %v986 = vpop.f32.mrb[0].mxu0
      %987 = vmatprep.mubr.bf16.mxu0 0
      %988 = vmatmul.mubr.bf16.gmra.mrb[0].mxu0 %v879
      %v989 = vpop.f32.mrb[0].mxu0
      %v990 = vadd.f32 %v851, %v989
      %v991 = vpop.f32.mrb[0].mxu0
      %v992 = vpop.f32.mrb[0].mxu0
      %v993 = vadd.f32 %v851, %v992
      %v994 = vpop.f32.mrb[0].mxu0
      %995 = vmatprep.mubr.bf16.mxu0 0
      %996 = vmatmul.mubr.bf16.gmra.mrb[0].mxu0 %v882
      %v997 = vpop.f32.mrb[0].mxu0
      %v998 = vadd.f32 %v851, %v997
      %v999 = vpop.f32.mrb[0].mxu0
      %v1000 = vpop.f32.mrb[0].mxu0
      %v1001 = vadd.f32 %v851, %v1000
      %v1002 = vpop.f32.mrb[0].mxu0
      %1003 = vmatprep.mubr.bf16.mxu0 0
      %1004 = vmatmul.mubr.bf16.gmra.mrb[0].mxu0 %v885
      %v1005 = vpop.f32.mrb[0].mxu0
      %v1006 = vadd.f32 %v851, %v1005
      %v1007 = vpop.f32.mrb[0].mxu0
      %v1008 = vpop.f32.mrb[0].mxu0
      %v1009 = vadd.f32 %v851, %v1008
      %v1010 = vpop.f32.mrb[0].mxu0
      %1011 = vmatprep.mubr.bf16.mxu0 0
      %1012 = vmatmul.mubr.bf16.gmra.mrb[0].mxu0 %v888
      %v1013 = vpop.f32.mrb[0].mxu0
      %v1014 = vadd.f32 %v851, %v1013
      %v1015 = vpop.f32.mrb[0].mxu0
      %v1016 = vpop.f32.mrb[0].mxu0
      %v1017 = vadd.f32 %v851, %v1016
      %v1018 = vpop.f32.mrb[0].mxu0
      %1019 = vmatprep.mubr.bf16.mxu0 0
      %1020 = vmatmul.mubr.bf16.gmra.mrb[0].mxu0 %v891
      %v1021 = vpop.f32.mrb[0].mxu0
      %v1022 = vadd.f32 %v851, %v1021
      %v1023 = vpop.f32.mrb[0].mxu0
      %v1024 = vpop.f32.mrb[0].mxu0
      %v1025 = vadd.f32 %v851, %v1024
      %v1026 = vpop.f32.mrb[0].mxu0
      %1027 = vmatprep.mubr.bf16.mxu0 0
      %1028 = vmatmul.mubr.bf16.gmra.mrb[0].mxu0 %v894
      %v1029 = vpop.f32.mrb[0].mxu0
      %v1030 = vadd.f32 %v851, %v1029
      %v1031 = vpop.f32.mrb[0].mxu0
      %v1032 = vpop.f32.mrb[0].mxu0
      %v1033 = vadd.f32 %v851, %v1032
      %v1034 = vpop.f32.mrb[0].mxu0
      %1035 = vmatprep.mubr.bf16.mxu0 0
      %1036 = vmatmul.mubr.bf16.gmra.mrb[0].mxu0 %v897
      %v1037 = vpop.f32.mrb[0].mxu0
      %v1038 = vadd.f32 %v851, %v1037
      %v1039 = vpop.f32.mrb[0].mxu0
      %v1040 = vpop.f32.mrb[0].mxu0
      %v1041 = vadd.f32 %v851, %v1040
      %v1042 = vpop.f32.mrb[0].mxu0
      %1043 = vmatprep.mubr.bf16.mxu0 0
      %1044 = vmatmul.mubr.bf16.gmra.mrb[0].mxu0 %v900
      %v1045 = vpop.f32.mrb[0].mxu0
      %v1046 = vadd.f32 %v851, %v1045
      %v1047 = vpop.f32.mrb[0].mxu0
      %v1048 = vpop.f32.mrb[0].mxu0
      %v1049 = vadd.f32 %v851, %v1048
      %v1050 = vpop.f32.mrb[0].mxu0
      %1051 = vmatprep.mubr.bf16.mxu0 0
      %1052 = vmatmul.mubr.bf16.gmra.mrb[0].mxu0 %v903
      %v1053 = vpop.f32.mrb[0].mxu0
      %v1054 = vadd.f32 %v851, %v1053
      %v1055 = vpop.f32.mrb[0].mxu0
      %v1056 = vpop.f32.mrb[0].mxu0
      %v1057 = vadd.f32 %v851, %v1056
      %v1058 = vpop.f32.mrb[0].mxu0
      %1059 = vmatprep.mubr.bf16.mxu0 0
      %1060 = vmatmul.mubr.bf16.gmra.mrb[0].mxu0 %v906
      %v1061 = vpop.f32.mrb[0].mxu0
      %v1062 = vadd.f32 %v851, %v1061
      %v1063 = vpop.f32.mrb[0].mxu0
      %v1064 = vpop.f32.mrb[0].mxu0
      %v1065 = vadd.f32 %v851, %v1064
      %v1066 = vpop.f32.mrb[0].mxu0
      %1067 = vmatprep.mubr.bf16.mxu0 0
      %1068 = vmatmul.mubr.bf16.gmra.mrb[0].mxu0 %v909
      %v1069 = vpop.f32.mrb[0].mxu0
      %v1070 = vadd.f32 %v851, %v1069
      %v1071 = vpop.f32.mrb[0].mxu0
      %v1072 = vpop.f32.mrb[0].mxu0
      %v1073 = vadd.f32 %v851, %v1072
      %v1074 = vpop.f32.mrb[0].mxu0
      %1075 = vmatprep.mubr.bf16.mxu0 0
      %1076 = vmatmul.mubr.bf16.gmra.mrb[0].mxu0 %v912
      %v1077 = vpop.f32.mrb[0].mxu0
      %v1078 = vadd.f32 %v851, %v1077
      %v1079 = vpop.f32.mrb[0].mxu0
      %v1080 = vpop.f32.mrb[0].mxu0
      %v1081 = vadd.f32 %v851, %v1080
      %v1082 = vpop.f32.mrb[0].mxu0
      %1083 = vmatprep.mubr.bf16.mxu0 0
      %1084 = vmatmul.mubr.bf16.gmra.mrb[0].mxu0 %v915
      %v1085 = vpop.f32.mrb[0].mxu0
      %v1086 = vadd.f32 %v851, %v1085
      %v1087 = vpop.f32.mrb[0].mxu0
      %v1088 = vpop.f32.mrb[0].mxu0
      %v1089 = vadd.f32 %v851, %v1088
      %v1090 = vpop.f32.mrb[0].mxu0
      %1091 = vmatprep.mubr.bf16.mxu0 0
      %1092 = vmatmul.mubr.bf16.gmra.mrb[0].mxu0 %v918
      %v1093 = vpop.f32.mrb[0].mxu0
      %v1094 = vadd.f32 %v851, %v1093
      %v1095 = vpop.f32.mrb[0].mxu0
      %v1096 = vpop.f32.mrb[0].mxu0
      %v1097 = vadd.f32 %v851, %v1096
      %v1098 = vpop.f32.mrb[0].mxu0
      %1099 = vmatprep.mubr.bf16.mxu0 0
      %1100 = vmatmul.mubr.bf16.gmra.mrb[0].mxu0 %v921
      %v1101 = vpop.f32.mrb[0].mxu0
      %v1102 = vadd.f32 %v851, %v1101
      %v1103 = vpop.f32.mrb[0].mxu0
      %v1104 = vpop.f32.mrb[0].mxu0
      %v1105 = vadd.f32 %v851, %v1104
      %v1106 = vpop.f32.mrb[0].mxu0
      %1107 = vdwg.mxu0
      %1108 = vst.msk [vmem:[%s172] sm:$0xff] %vm865, %v958
      %1109 = vst.msk [vmem:[%s172 + $0x8] sm:$0xff] %vm865, %v961
      %1110 = vst.msk [vmem:[%s172 + $0x10] sm:$0xff] %vm865, %v966
      %1111 = vst.msk [vmem:[%s172 + $0x18] sm:$0xff] %vm865, %v969
      %1112 = vst.msk [vmem:[%s172 + $0x20] sm:$0xff] %vm865, %v974
      %1113 = vst.msk [vmem:[%s172 + $0x28] sm:$0xff] %vm865, %v977
      %1114 = vst.msk [vmem:[%s172 + $0x30] sm:$0xff] %vm865, %v982
      %1115 = vst.msk [vmem:[%s172 + $0x38] sm:$0xff] %vm865, %v985
      %1116 = vst.msk [vmem:[%s172 + $0x40] sm:$0xff] %vm865, %v990
      %1117 = vst.msk [vmem:[%s172 + $0x48] sm:$0xff] %vm865, %v993
      %1118 = vst.msk [vmem:[%s172 + $0x50] sm:$0xff] %vm865, %v998
      %1119 = vst.msk [vmem:[%s172 + $0x58] sm:$0xff] %vm865, %v1001
      %1120 = vst.msk [vmem:[%s172 + $0x60] sm:$0xff] %vm865, %v1006
      %1121 = vst.msk [vmem:[%s172 + $0x68] sm:$0xff] %vm865, %v1009
      %1122 = vst.msk [vmem:[%s172 + $0x70] sm:$0xff] %vm865, %v1014
      %1123 = vst.msk [vmem:[%s172 + $0x78] sm:$0xff] %vm865, %v1017
      %1124 = vst.msk [vmem:[%s172 + $0x80] sm:$0xff] %vm865, %v1022
      %1125 = vst.msk [vmem:[%s172 + $0x88] sm:$0xff] %vm865, %v1025
      %1126 = vst.msk [vmem:[%s172 + $0x90] sm:$0xff] %vm865, %v1030
      %1127 = vst.msk [vmem:[%s172 + $0x98] sm:$0xff] %vm865, %v1033
      %1128 = vst.msk [vmem:[%s172 + $0xa0] sm:$0xff] %vm865, %v1038
      %1129 = vst.msk [vmem:[%s172 + $0xa8] sm:$0xff] %vm865, %v1041
      %1130 = vst.msk [vmem:[%s172 + $0xb0] sm:$0xff] %vm865, %v1046
      %1131 = vst.msk [vmem:[%s172 + $0xb8] sm:$0xff] %vm865, %v1049
      %1132 = vst.msk [vmem:[%s172 + $0xc0] sm:$0xff] %vm865, %v1054
      %1133 = vst.msk [vmem:[%s172 + $0xc8] sm:$0xff] %vm865, %v1057
      %1134 = vst.msk [vmem:[%s172 + $0xd0] sm:$0xff] %vm865, %v1062
      %1135 = vst.msk [vmem:[%s172 + $0xd8] sm:$0xff] %vm865, %v1065
      %1136 = vst.msk [vmem:[%s172 + $0xe0] sm:$0xff] %vm865, %v1070
      %1137 = vst.msk [vmem:[%s172 + $0xe8] sm:$0xff] %vm865, %v1073
      %1138 = vst.msk [vmem:[%s172 + $0xf0] sm:$0xff] %vm865, %v1078
      %1139 = vst.msk [vmem:[%s172 + $0xf8] sm:$0xff] %vm865, %v1081
      %1140 = vst.msk [vmem:[%s172 + $0x100] sm:$0xff] %vm865, %v1086
      %1141 = vst.msk [vmem:[%s172 + $0x108] sm:$0xff] %vm865, %v1089
      %1142 = vst.msk [vmem:[%s172 + $0x110] sm:$0xff] %vm865, %v1094
      %1143 = vst.msk [vmem:[%s172 + $0x118] sm:$0xff] %vm865, %v1097
      %1144 = vst.msk [vmem:[%s172 + $0x120] sm:$0xff] %vm865, %v1102
      %1145 = vst.msk [vmem:[%s172 + $0x128] sm:$0xff] %vm865, %v1105
      %s1146 = smul.u32 38, %s14
      %p1147 = scmp.lt.s32.totalorder %s1146, 75
      %s1148 = scalar_select %p1147, %s1146, 75
      %s1149 = smul.addr %s1148, 8
      %s1150 = scalar_lea.vmem %s3, %s1149
      // Predicated region
      $region33: #{tpu_custom_call.1} parent=31 // pred_check
        %p1151 = pneg %p100
      $region34: #{tpu_custom_call.1} parent=31 // pred_check_branch
        %1153 = sbr.rel (%p1151) target = $region36
      $region35: #{tpu_custom_call.1} parent=31 // pred_region
        %s1154 = smul.u32 38, %s14
      $region36: #{tpu_custom_call.1} parent=31 // pred_fallthru
        _
    $region32: #{tpu_custom_call.1} parent=5 // pred_fallthru
      _
    %p1155 = scmp.le.s32.totalorder 2, %s9
    // Predicated region
    $region37: #{tpu_custom_call.1} parent=5 // pred_check
      %p1156 = pneg %p1155
    $region38: #{tpu_custom_call.1} parent=5 // pred_check_branch
      %1158 = sbr.rel (%p1156) target = $region40
    $region39: #{tpu_custom_call.1} parent=5 // pred_region
      %s1159 = ssub.s32 %s9, 2
      // Predicated region
      $region41: #{tpu_custom_call.1} parent=39 // pred_check
        %p1160 = pneg %p106
      $region42: #{tpu_custom_call.1} parent=39 // pred_check_branch
        %1162 = sbr.rel (%p1160) target = $region44
      $region43: #{tpu_custom_call.1} parent=39 // pred_region
        %s1163 = smul.u32 38, %s15
        %p1164 = scmp.lt.s32.totalorder %s1163, 75
        %s1165 = scalar_select %p1164, %s1163, 75
        %s1166 = smul.addr %s1165, 8
        %s1167 = scalar_lea.vmem %s3, %s1166
      $region44: #{tpu_custom_call.1} parent=39 // pred_fallthru
        _
    $region40: #{tpu_custom_call.1} parent=5 // pred_fallthru
      _
  $region6: #{tpu_custom_call.1} parent=0 // loop_footer
    %s13 = sadd.s32 1, %s9
  $region7: #{tpu_custom_call.1} parent=0 // loop_footer_branch
    %8 = sbr.rel target = $region3
  $region8: #{tpu_custom_call.1} parent=0 // loop_exit
    _

</llo_original>
